<compile_context>
chip_gen: v5e
topology: v5e:2x2
jax: 0.10.0
libtpu: 0.0.40
codegen_flags: <defaults>
</compile_context>

<pallas_src>
import functools

import jax
import jax.numpy as jnp
from jax.experimental import pallas as pl
from jax.experimental.pallas import tpu as pltpu

LANE = 128


def _linear_kernel(x_ref, w_ref, b_ref, o_ref, *, d_out):
    # x_ref: [tile_b, D_in]   activations
    # w_ref: [D_in, D_pad]    pre-transposed, lane-padded weight (resident)
    # b_ref: [1, D_out]       unpadded bias
    # o_ref: [tile_b, D_out]  unpadded output -> minimal HBM writeback
    acc = jnp.dot(x_ref[...], w_ref[...], preferred_element_type=jnp.float32)
    if acc.shape[-1] != d_out:
        acc = acc[:, :d_out]  # drop MXU lane padding before touching HBM
    o_ref[...] = (acc + b_ref[...]).astype(o_ref.dtype)


def logistic_regression_forward(x, weight, bias, *, tile_b=2048):
    """x: [B, D_in], weight: [D_out, D_in], bias: [D_out] -> [B, D_out]."""
    B, D_in = x.shape
    D_out = weight.shape[0]

    # One-time parameter prep (constant-foldable under jit when params are
    # static): orient W as [D_in, D_pad] so the kernel does a plain
    # [M,K]x[K,N] MXU matmul with a lane-aligned RHS.
    D_pad = ((D_out + LANE - 1) // LANE) * LANE
    w_t = weight.T  # [D_in, D_out]
    if D_pad != D_out:
        w_t = jnp.pad(w_t, ((0, 0), (0, D_pad - D_out)))
    b2 = bias.reshape(1, D_out)

    kernel = functools.partial(_linear_kernel, d_out=D_out)

    if B <= tile_b:
        # Small problem: everything fits in VMEM -> no grid, no pipeline
        # machinery; one MXU push + one (small, unpadded) store.
        return pl.pallas_call(
            kernel,
            out_shape=jax.ShapeDtypeStruct((B, D_out), x.dtype),
            in_specs=[
                pl.BlockSpec(memory_space=pltpu.MemorySpace.VMEM),
                pl.BlockSpec(memory_space=pltpu.MemorySpace.VMEM),
                pl.BlockSpec(memory_space=pltpu.MemorySpace.VMEM),
            ],
            out_specs=pl.BlockSpec(memory_space=pltpu.MemorySpace.VMEM),
        )(x, w_t, b2)

    # Scaling path: grid over batch only.  W and bias stay resident across
    # grid steps; D_in is small so no K axis.  Output is written unpadded,
    # so HBM traffic per tile is dominated by the x read.
    grid = (pl.cdiv(B, tile_b),)
    return pl.pallas_call(
        kernel,
        out_shape=jax.ShapeDtypeStruct((B, D_out), x.dtype),
        grid=grid,
        in_specs=[
            pl.BlockSpec((tile_b, D_in), lambda i: (i, 0)),
            pl.BlockSpec((D_in, D_pad), lambda i: (0, 0)),   # W resident
            pl.BlockSpec((1, D_out), lambda i: (0, 0)),       # bias resident
        ],
        out_specs=pl.BlockSpec((tile_b, D_out), lambda i: (i, 0)),
        compiler_params=pltpu.CompilerParams(
            dimension_semantics=("parallel",)),
    )(x, w_t, b2)


if __name__ == "__main__":
    # Small shapes implied by the module: batch=8, input_dim=32, output_dim=8.
    B, D_in, D_out = 8, 32, 8

    key = jax.random.PRNGKey(0)
    k_x, k_w, k_b = jax.random.split(key, 3)

    x = jax.random.normal(k_x, (B, D_in), dtype=jnp.float32)
    # Deterministic "PyTorch-style" uniform init: U(-1/sqrt(D_in), 1/sqrt(D_in))
    bound = 1.0 / (D_in ** 0.5)
    weight = jax.random.uniform(k_w, (D_out, D_in), minval=-bound, maxval=bound,
                                dtype=jnp.float32)
    bias = jax.random.uniform(k_b, (D_out,), minval=-bound, maxval=bound,
                              dtype=jnp.float32)

    # Small-batch (grid-free) path.
    out = logistic_regression_forward(x, weight, bias)
    jax.block_until_ready(out)
    ref = x @ weight.T + bias
    assert out.shape == (B, D_out)
    assert jnp.allclose(out, ref, atol=1e-5, rtol=1e-5)

    # Also exercise the batch-tiled (gridded) scaling path: 2 large tiles
    # (even tile count -> balanced across v7x's two TensorCores).
    Bb = 4096
    xb = jax.random.normal(k_x, (Bb, D_in), dtype=jnp.float32)
    out_b = logistic_regression_forward(xb, weight, bias, tile_b=2048)
    jax.block_until_ready(out_b)
    ref_b = xb @ weight.T + bias
    assert out_b.shape == (Bb, D_out)
    assert jnp.allclose(out_b, ref_b, atol=1e-5, rtol=1e-5)

    print("KERNEL_OK")
</pallas_src>

<mosaic_0001>
module attributes {stable_mosaic.version = 11 : i64} {
  func.func @_linear_kernel(%arg0: memref<8x32xf32, #tpu.memory_space<vmem>>, %arg1: memref<32x128xf32, #tpu.memory_space<vmem>>, %arg2: memref<1x8xf32, #tpu.memory_space<vmem>>, %arg3: memref<8x8xf32, #tpu.memory_space<vmem>>) attributes {dimension_semantics = [], scalar_prefetch = 0 : i64, scratch_operands = 0 : i64, tpu.core_type = #tpu.core_type<tc>} {
    %c0 = arith.constant 0 : index
    %c0_0 = arith.constant 0 : index
    %0 = vector.load %arg0[%c0, %c0_0] : memref<8x32xf32, #tpu.memory_space<vmem>>, vector<8x32xf32>
    %c0_1 = arith.constant 0 : index
    %c0_2 = arith.constant 0 : index
    %1 = vector.load %arg1[%c0_1, %c0_2] : memref<32x128xf32, #tpu.memory_space<vmem>>, vector<32x128xf32>
    %cst = arith.constant dense<0.000000e+00> : vector<8x128xf32>
    %2 = tpu.matmul %0, %1, %cst {dimension_numbers = #tpu.dot_dimension_numbers<[1], [0], [0], [1], [0, 0, 1, 1], [], []>} : vector<8x32xf32>, vector<32x128xf32>, vector<8x128xf32> -> vector<8x128xf32>
    %3 = vector.extract_strided_slice %2 {offsets = [0, 0], sizes = [8, 8], strides = [1, 1]} : vector<8x128xf32> to vector<8x8xf32>
    %c0_3 = arith.constant 0 : index
    %c0_4 = arith.constant 0 : index
    %4 = vector.load %arg2[%c0_3, %c0_4] : memref<1x8xf32, #tpu.memory_space<vmem>>, vector<1x8xf32>
    %5 = vector.broadcast %4 : vector<1x8xf32> to vector<8x8xf32>
    %6 = arith.addf %3, %5 : vector<8x8xf32>
    %c0_5 = arith.constant 0 : index
    %c0_6 = arith.constant 0 : index
    %7 = vector.load %arg3[%c0_5, %c0_6] : memref<8x8xf32, #tpu.memory_space<vmem>>, vector<8x8xf32>
    tpu.vector_store %arg3[%c0_5, %c0_6], %6 {strides = array<i32>} : memref<8x8xf32, #tpu.memory_space<vmem>>, vector<8x8xf32>,
    return
  }
}

</mosaic_0001>

<llo_original>
// kernel: tpu_custom_call.1
$region0: #{tpu_custom_call.1}
  #allocation0 [shape = 'u32[]', space=smem, size = 0x4, offset = 0x4, fixed_abs, tag = 'smem constant byte address 0x4 - core index']
  #allocation1 [shape = 'u32[72,128]{1,0:T(1,128)}', space=vmem, size = 0x9000, scoped, tag = 'internal scratch']
  %s0 = inlined_call_operand.hbm [shape: f32[8,32], index: 0, kind: input, shape index: {}]
  %s1 = inlined_call_operand.hbm [shape: f32[32,128], index: 1, kind: input, shape index: {}]
  %s2 = inlined_call_operand.vmem [shape: f32[1,8], index: 2, kind: input, shape index: {}]
  %s3 = inlined_call_operand.hbm [shape: f32[8,8], index: 3, kind: output, shape index: {}]
  %s4 = sld [smem:[#allocation0]]
  $region30: #{tpu_custom_call.1} parent=0
    _
  %s6 = ssub.s32 1, %s4
  %s7 = scalar_select 0, %s6, %s4
  $region1: #{tpu_custom_call.1} parent=0
    #allocation2 [shape = 'u8[4096]{0}', space=vmem, size = 0x1000, scoped, tag = 'input window, operand 0, single buffered']
    #allocation3 [shape = 's32[1]{0}', space=sflag, size = 0x4, scoped, tag = 'scoped memory for tpu_custom_call.1']
    #allocation4 [shape = 's32[1]{0}', space=sflag, size = 0x4, scoped, tag = 'scoped memory for tpu_custom_call.1']
    #allocation5 [shape = 'u8[16384]{0}', space=vmem, size = 0x4000, scoped, tag = 'input window, operand 1, single buffered']
    #allocation6 [shape = 's32[1]{0}', space=sflag, size = 0x4, scoped, tag = 'scoped memory for tpu_custom_call.1']
    #allocation7 [shape = 'u8[4096]{0}', space=vmem, size = 0x1000, scoped, tag = 'output window, operand 0, single buffered']
    %8 = vsyncpa [#allocation3], 0
    %9 = vsyncpa [#allocation6], 0
    %10 = vsyncpa [#allocation4], 0
    // Predicated region
    $region2: #{tpu_custom_call.1} parent=1 // pred_check
      _
    $region3: #{tpu_custom_call.1} parent=1 // pred_check_branch
      %12 = sbr.rel (0) target = $region5
    $region4: #{tpu_custom_call.1} parent=1 // pred_region
      %14 = vsyncadd [#allocation3], 0
      %s16 = sshll.u32 %s0, 4
      %s17 = int_to_ptr.hbm [resolvable:$true] %s16
      %s18 = sshll.u32 [#allocation2], 4
      %s19 = int_to_ptr.vmem [resolvable:$true] %s18
      %21 = dma.hbm_to_vmem [thread:$0]  %s17, 128, %s19, [#allocation3]
    $region5: #{tpu_custom_call.1} parent=1 // pred_fallthru
      _
    // Predicated region
    $region6: #{tpu_custom_call.1} parent=1 // pred_check
      _
    $region7: #{tpu_custom_call.1} parent=1 // pred_check_branch
      %23 = sbr.rel (0) target = $region9
    $region8: #{tpu_custom_call.1} parent=1 // pred_region
      %25 = vsyncadd [#allocation6], 0
      %s26 = sshll.u32 %s1, 4
      %s27 = int_to_ptr.hbm [resolvable:$true] %s26
      %s28 = sshll.u32 [#allocation5], 4
      %s29 = int_to_ptr.vmem [resolvable:$true] %s28
      %34 = dma.hbm_to_vmem [thread:$0]  %s27, 512, %s29, [#allocation6], 128, 128, 8
    $region9: #{tpu_custom_call.1} parent=1 // pred_fallthru
      _
    // Predicated region
    $region10: #{tpu_custom_call.1} parent=1 // pred_check
      _
    $region11: #{tpu_custom_call.1} parent=1 // pred_check_branch
      %36 = sbr.rel (0) target = $region13
    $region12: #{tpu_custom_call.1} parent=1 // pred_region
      _
    $region13: #{tpu_custom_call.1} parent=1 // pred_fallthru
      _
    // Predicated region
    $region14: #{tpu_custom_call.1} parent=1 // pred_check
      _
    $region15: #{tpu_custom_call.1} parent=1 // pred_check_branch
      %38 = sbr.rel (0) target = $region17
    $region16: #{tpu_custom_call.1} parent=1 // pred_region
      %40 = dma.done [#allocation3], 128
    $region17: #{tpu_custom_call.1} parent=1 // pred_fallthru
      _
    // Predicated region
    $region18: #{tpu_custom_call.1} parent=1 // pred_check
      _
    $region19: #{tpu_custom_call.1} parent=1 // pred_check_branch
      %42 = sbr.rel (0) target = $region21
    $region20: #{tpu_custom_call.1} parent=1 // pred_region
      %44 = dma.done [#allocation6], 512
    $region21: #{tpu_custom_call.1} parent=1 // pred_fallthru
      _
    %v45 = vld [vmem:[#allocation2] sm:$0xff]
    %v46 = vld [vmem:[#allocation5] sm:$0xff]
    %v47 = vld [vmem:[#allocation5 + $0x8] sm:$0xff]
    %v48 = vld [vmem:[#allocation5 + $0x10] sm:$0xff]
    %v49 = vld [vmem:[#allocation5 + $0x18] sm:$0xff]
    %vm50 = vcmask 261120
    %v52 = vsel %vm50, %v45, 0
    %54 = vmatpush.msra.mxu0 0.0
    %55 = vmatpush.msra.mxu0 0.0
    %56 = vmatpush.msra.mxu0 0.0
    %57 = vmatpush.msra.mxu0 0.0
    %58 = vmatpush.msra.mxu0 0.0
    %59 = vmatpush.msra.mxu0 0.0
    %60 = vmatpush.msra.mxu0 0.0
    %61 = vmatpush.msra.mxu0 0.0
    %62 = vmatpush.msra.mxu0 0.0
    %63 = vmatpush.msra.mxu0 0.0
    %64 = vmatpush.msra.mxu0 0.0
    %65 = vmatpush.msra.mxu0 0.0
    %66 = vmatpush.msra.mxu0 %v49
    %67 = vmatpush.msra.mxu0 %v48
    %68 = vmatpush.msra.mxu0 %v47
    %69 = vmatpush.msra.mxu0 %v46
    %70 = vmatmul.f32.gmra.mxu0 %v52
    %v71 = vpop.f32.mrf.mxu0
    %v72 = vadd.f32 0.0, %v71
    %73 = vdwg.mxu0
    %v74 = vld [vmem:[%s2] sm:$0x1]
    %v76 = vperm.slane %v74, 0
    %v78 = vadd.f32 %v72, %v76
    %vm79 = vcmask 64512
    %80 = vst.msk [vmem:[#allocation7] sm:$0xff] %vm79, %v78
    // Predicated region
    $region22: #{tpu_custom_call.1} parent=1 // pred_check
      _
    $region23: #{tpu_custom_call.1} parent=1 // pred_check_branch
      %82 = sbr.rel (0) target = $region25
    $region24: #{tpu_custom_call.1} parent=1 // pred_region
      %84 = vsyncadd [#allocation4], 0
      %s86 = sshll.u32 [#allocation7], 4
      %s87 = int_to_ptr.vmem [resolvable:$true] %s86
      %s88 = sshll.u32 %s3, 4
      %s89 = int_to_ptr.hbm [resolvable:$true] %s88
      %91 = dma.vmem_to_hbm [thread:$0]  %s87, 128, %s89, [#allocation4]
    $region25: #{tpu_custom_call.1} parent=1 // pred_fallthru
      _
    // Predicated region
    $region26: #{tpu_custom_call.1} parent=1 // pred_check
      _
    $region27: #{tpu_custom_call.1} parent=1 // pred_check_branch
      %93 = sbr.rel (0) target = $region29
    $region28: #{tpu_custom_call.1} parent=1 // pred_region
      %95 = dma.done [#allocation4], 128
    $region29: #{tpu_custom_call.1} parent=1 // pred_fallthru
      _
    %96 = vsyncpa [#allocation3], 1
    %97 = vsyncpa [#allocation6], 1
    %98 = vsyncpa [#allocation4], 1

</llo_original>
